<compile_context>
chip_gen: v7x
topology: tpu7x:2x2x1
jax: 0.10.0
libtpu: 0.0.40
codegen_flags: <defaults>
</compile_context>

<pallas_src>
import math
import functools

import jax
import jax.numpy as jnp
import numpy as np
from jax.experimental import pallas as pl
from jax.experimental.pallas import tpu as pltpu


# ------------------------- parameter glue (host-side) ----------------------------

def compute_theta_from_local_k(decay_type, local_k, decay_clip):
    local_k = float(local_k)
    decay_clip = float(decay_clip)
    if decay_type == "Gaussian":
        return math.sqrt(local_k ** 2 / (-2.0 * math.log(decay_clip)))
    elif decay_type == "Exponential":
        return -math.log(decay_clip) / local_k
    elif decay_type == "InverseQuadratic":
        return local_k / math.sqrt((1.0 - decay_clip) / decay_clip)
    else:
        raise ValueError("Invalid decay type.")


class DecayNetworkParams:
    """Mirrors DecayNetwork.__init__ / init_around_k / reparam deterministically."""

    def __init__(self, decay_type, num_heads, decay_clip, min_local_k=1,
                 max_local_k=25, init_k=7):
        self.decay_type = decay_type
        self.decay_clip = decay_clip
        self.num_heads = num_heads
        t1 = compute_theta_from_local_k(decay_type, min_local_k, decay_clip)
        t2 = compute_theta_from_local_k(decay_type, max_local_k, decay_clip)
        self.theta_min = min(t1, t2)
        self.theta_max = max(t1, t2)
        # init_around_k(init_k, num_heads)
        lo = compute_theta_from_local_k(decay_type, init_k - 1, decay_clip)
        hi = compute_theta_from_local_k(decay_type, init_k + 1, decay_clip)
        ti_min, ti_max = min(lo, hi), max(lo, hi)
        rng = ti_max - ti_min
        ti_min += rng * 0.25
        ti_max -= rng * 0.25
        lam_min = (ti_min - self.theta_min) / (self.theta_max - self.theta_min)
        lam_max = (ti_max - self.theta_min) / (self.theta_max - self.theta_min)
        self.lambda_p = jnp.linspace(lam_min, lam_max, num_heads, dtype=jnp.float32)

    def reparam(self):
        lam = jnp.clip(self.lambda_p, 0.0, 1.0)
        return self.theta_min + lam * (self.theta_max - self.theta_min)


def decay_coefficients(theta, decay_type):
    """Precompute per-head coefficient so the kernel needs one mul per element."""
    theta = theta.astype(jnp.float32)
    if decay_type == "Gaussian":
        return -1.0 / (2.0 * theta * theta)      # decay = exp(d^2 * c)
    elif decay_type == "Exponential":
        return -theta                            # decay = exp(d * c)
    elif decay_type == "InverseQuadratic":
        return 1.0 / (theta * theta)             # decay = 1 / (1 + d^2 * c)
    elif decay_type is None:
        return jnp.zeros_like(theta)
    else:
        raise ValueError(f"Unknown DECAY_TYPE: {decay_type}")


# ------------------------------- Pallas kernel -----------------------------------

def _decay_kernel(coef_ref, dist_ref, out_ref, *, decay_type):
    # coef_ref: VMEM (H, 1) f32  -- per-head coefficient column (constant block)
    # dist_ref: VMEM (1, tl) f32 -- flattened distance tile (batch dim squeezed)
    # out_ref : VMEM (H, tl)     -- all heads for this tile (batch dim squeezed)
    d = dist_ref[...]                 # (1, tl)
    c = coef_ref[...]                 # (H, 1)
    if decay_type == "Gaussian":
        res = jnp.exp((d * d) * c)                      # d^2 once; exp -> EUP
    elif decay_type == "Exponential":
        res = jnp.exp(d * c)
    elif decay_type == "InverseQuadratic":
        # reciprocal on the EUP slot (approx); VALU does one mul + one add / elem
        res = pl.reciprocal(1.0 + (d * d) * c, approx=True)
    elif decay_type is None:
        res = jnp.zeros((c.shape[0], d.shape[1]), dtype=jnp.float32)
    else:
        raise ValueError(f"Unknown DECAY_TYPE: {decay_type}")
    out_ref[...] = res.astype(out_ref.dtype)


def _pick_lane_tile(L, H, elem_bytes, max_block_bytes=2 << 20):
    """Largest lane tile tl that divides L, is a multiple of 128 (or tl == L),
    and keeps the (H, tl) output block <= max_block_bytes (safe on v7x's
    64 MiB VMEM even when double-buffered alongside the distance tile)."""
    if L % 128 != 0:
        return L            # full-dim last block still satisfies the layout rule
    cap = max(128, max_block_bytes // max(1, H * elem_bytes))
    tl = 128
    cand = 128
    while cand <= min(L, cap):
        if L % cand == 0:
            tl = cand
        cand *= 2
    return tl


def decay_forward(distance, theta, decay_type, head_ind=None, out_dtype=jnp.float32):
    """distance: [B, N, M] f32, theta: [num_heads] f32 -> decay [B, H, N, M].

    head_ind=None means all heads. Math is f32; out_dtype may be set to
    jnp.bfloat16 to halve HBM write traffic if downstream consumers allow it.
    """
    distance = distance.astype(jnp.float32)
    if head_ind is not None:
        theta = theta[head_ind]
    H = int(theta.shape[0])
    B, N, M = distance.shape
    L = N * M

    coefs = decay_coefficients(theta, decay_type).reshape(H, 1)

    # Flatten the spatial dims into one lane-dense axis (wrapper-side reshape,
    # layout plumbing only) so stores are full-lane vst's even for small N.
    dist_flat = distance.reshape(B, 1, L)

    elem_bytes = jnp.dtype(out_dtype).itemsize
    tl = _pick_lane_tile(L, H, elem_bytes)
    grid = (B, L // tl)

    kernel = functools.partial(_decay_kernel, decay_type=decay_type)
    out_flat = pl.pallas_call(
        kernel,
        out_shape=jax.ShapeDtypeStruct((B, H, L), out_dtype),
        grid=grid,
        in_specs=[
            pl.BlockSpec((H, 1), lambda b, l: (0, 0)),            # coefficients
            pl.BlockSpec((None, 1, tl), lambda b, l: (b, 0, l)),  # distance tile
        ],
        out_specs=pl.BlockSpec((None, H, tl), lambda b, l: (b, 0, l)),
        compiler_params=pltpu.CompilerParams(
            dimension_semantics=("parallel", "parallel"),
            vmem_limit_bytes=32 * 1024 * 1024,
        ),
    )(coefs, dist_flat)
    return out_flat.reshape(B, H, N, M)


# ---------------------------------- reference -------------------------------------

def decay_forward_ref(distance, theta, decay_type):
    th = theta[None, :, None, None]       # [1, H, 1, 1]
    d = distance[:, None, :, :]           # [B, 1, N, N]
    if decay_type == "Gaussian":
        return jnp.exp(-(d ** 2) / (2.0 * th ** 2))
    elif decay_type == "Exponential":
        return jnp.exp(-th * d)
    elif decay_type == "InverseQuadratic":
        return 1.0 / (1.0 + (d / th) ** 2)
    else:
        return jnp.zeros((d.shape[0], th.shape[1], d.shape[2], d.shape[3]), d.dtype)


# ------------------------------------ main -----------------------------------------

if __name__ == "__main__":
    B, H, N = 2, 4, 16
    decay_clip = 0.5

    key = jax.random.PRNGKey(0)
    idx = jnp.arange(N, dtype=jnp.float32)
    base = jnp.abs(idx[:, None] - idx[None, :])
    noise = jax.random.uniform(key, (B, N, N), dtype=jnp.float32)
    distance = base[None, :, :] + 0.1 * (noise + jnp.swapaxes(noise, 1, 2))

    # (decay_type, rtol, atol): InverseQuadratic uses the approx EUP reciprocal.
    cases = [
        ("Gaussian", 1e-5, 1e-5),
        ("Exponential", 1e-5, 1e-5),
        ("InverseQuadratic", 1e-2, 1e-2),
    ]
    for decay_type, rtol, atol in cases:
        params = DecayNetworkParams(decay_type, num_heads=H, decay_clip=decay_clip,
                                    min_local_k=1, max_local_k=25, init_k=7)
        theta = params.reparam()          # [H] == reparam(lambda_p) for all heads

        out = decay_forward(distance, theta, decay_type)
        out = jax.block_until_ready(out)

        ref = decay_forward_ref(distance, theta, decay_type)
        np.testing.assert_allclose(np.asarray(out), np.asarray(ref),
                                   rtol=rtol, atol=atol)

    # TODO(synk): decay_type=None path (torch.zeros_like(distance)) is unreachable
    # through __init__ (compute_theta_from_local_k raises); kernel emits zero heads.
    print("KERNEL_OK")
</pallas_src>

<mosaic_0001>
module attributes {stable_mosaic.version = 11 : i64} {
  func.func @_decay_kernel(%arg0: i32, %arg1: i32, %arg2: memref<4x1xf32, #tpu.memory_space<vmem>>, %arg3: memref<1x1x256xf32, #tpu.memory_space<vmem>>, %arg4: memref<1x4x256xf32, #tpu.memory_space<vmem>>) attributes {dimension_semantics = [#tpu.dimension_semantics<parallel>, #tpu.dimension_semantics<parallel>], iteration_bounds = array<i64: 2, 1>, scalar_prefetch = 0 : i64, scratch_operands = 0 : i64, tpu.core_type = #tpu.core_type<tc>, window_params = [{pipeline_mode = #tpu.pipeline_mode<synchronous>, transform_indices = @transform_0, window_bounds = array<i64: 4, 1>}, {transform_indices = @transform_1, window_bounds = array<i64: 1, 1, 256>}, {transform_indices = @transform_2, window_bounds = array<i64: 1, 4, 256>}]} {
    %c0 = arith.constant 0 : index
    %c0_0 = arith.constant 0 : index
    %c0_1 = arith.constant 0 : index
    %0 = vector.load %arg3[%c0, %c0_0, %c0_1] : memref<1x1x256xf32, #tpu.memory_space<vmem>>, vector<1x1x256xf32>
    %1 = vector.shape_cast %0 : vector<1x1x256xf32> to vector<1x256xf32>
    %c0_2 = arith.constant 0 : index
    %c0_3 = arith.constant 0 : index
    %2 = vector.load %arg2[%c0_2, %c0_3] : memref<4x1xf32, #tpu.memory_space<vmem>>, vector<4x1xf32>
    %3 = arith.mulf %1, %1 : vector<1x256xf32>
    %4 = vector.broadcast %3 : vector<1x256xf32> to vector<4x256xf32>
    %5 = vector.broadcast %2 : vector<4x1xf32> to vector<4x256xf32>
    %6 = arith.mulf %4, %5 : vector<4x256xf32>
    %7 = math.exp %6 : vector<4x256xf32>
    %c0_4 = arith.constant 0 : index
    %c0_5 = arith.constant 0 : index
    %c0_6 = arith.constant 0 : index
    %8 = vector.load %arg4[%c0_4, %c0_5, %c0_6] : memref<1x4x256xf32, #tpu.memory_space<vmem>>, vector<1x4x256xf32>
    %9 = vector.shape_cast %8 : vector<1x4x256xf32> to vector<4x256xf32>
    %10 = vector.shape_cast %7 : vector<4x256xf32> to vector<1x4x256xf32>
    tpu.vector_store %arg4[%c0_4, %c0_5, %c0_6], %10 {strides = array<i32>} : memref<1x4x256xf32, #tpu.memory_space<vmem>>, vector<1x4x256xf32>,
    return
  }
  func.func @transform_0(%arg0: i32, %arg1: i32) -> (i32, i32) {
    %c0_i32 = arith.constant 0 : i32
    %c0_i32_0 = arith.constant 0 : i32
    %c0_i32_1 = arith.constant 0 : i32
    return %c0_i32, %c0_i32_0 : i32, i32
  }
  func.func @transform_1(%arg0: i32, %arg1: i32) -> (i32, i32, i32) {
    %c0_i32 = arith.constant 0 : i32
    %c0_i32_0 = arith.constant 0 : i32
    return %arg0, %c0_i32, %arg1 : i32, i32, i32
  }
  func.func @transform_2(%arg0: i32, %arg1: i32) -> (i32, i32, i32) {
    %c0_i32 = arith.constant 0 : i32
    %c0_i32_0 = arith.constant 0 : i32
    return %arg0, %c0_i32, %arg1 : i32, i32, i32
  }
}

</mosaic_0001>

<llo_original>
// kernel: tpu_custom_call.1
$region0: #{tpu_custom_call.1}
  #allocation0 [shape = 'u32[]', space=smem, size = 0x4, offset = 0x4, fixed_abs, tag = 'smem constant byte address 0x4 - core index']
  #allocation1 [shape = 'u32[144,128]{1,0:T(1,128)}', space=vmem, size = 0x12000, scoped, tag = 'internal scratch']
  %s0 = inlined_call_operand.vmem [shape: f32[4,1], index: 0, kind: input, shape index: {}]
  %s1 = inlined_call_operand.vmem [shape: f32[2,1,256], index: 1, kind: input, shape index: {}]
  %s2 = inlined_call_operand.hbm [shape: f32[2,4,256], index: 2, kind: output, shape index: {}]
  %s3 = sld [smem:[#allocation0]]
  $region41: #{tpu_custom_call.1} parent=0
    _
  %s5 = ssub.s32 1, %s3
  %s6 = scalar_select 0, %s5, %s3
  $region1: #{tpu_custom_call.1} parent=0
    #allocation2 [shape = 'u8[8192]{0}', space=vmem, size = 0x2000, scoped, tag = 'output window, operand 0']
    #allocation3 [shape = 's32[2]{0}', space=sflag, size = 0x8, scoped, tag = 'scoped memory for tpu_custom_call.1']
    %7 = vsyncpa [#allocation3], 0
    %s8 = scalar_lea.sflag [#allocation3], 1
    %9 = vsyncpa %s8, 0
    loop: start=0, step=1, limit=4
    $region2: #{tpu_custom_call.1} parent=1 // loop_pre_header
      _
    $region3: #{tpu_custom_call.1} parent=1 // loop_header
      %s11 = sphi 0, %s15
      %p12 = scmp.ge.s32.totalorder %s11, 4
      %s18 = sphi 0, %s30
      %s19 = sphi 0, %s26
      %s20 = sphi 0, %s18
      %s21 = sphi 0, %s19
      %s22 = sphi 0, %s20
      %s23 = sphi 0, %s21
      %s31 = sphi 0, %s31
      %s33 = sphi 0, %s31
      %s34 = sphi 0, %s33
      %s48 = sphi 0, %s34
      %s56 = sphi 0, %s58
      %s59 = sphi 0, %s56
      %s60 = sphi 0, %s59
      %s76 = sphi 0, %s60
      %s84 = sphi 0, %s86
      %s87 = sphi 0, %s84
      %s88 = sphi 0, %s87
      %s104 = sphi 0, %s88
    $region4: #{tpu_custom_call.1} parent=1 // loop_header_branch
      %14 = sbr.rel (%p12) target = $region8
    $region5: #{tpu_custom_call.1} parent=1 // loop_body
      %s16 = ssub.s32 %s11, 1
      %s17 = ssub.s32 %s11, 2
      %s24 = sadd.s32 1, %s19
      %p25 = scmp.ge.s32.totalorder %s24, 1
      %s26 = scalar_select %p25, 0, %s24
      %s27 = sadd.s32 1, %s18
      %s28 = scalar_select %p25, %s27, %s18
      %p29 = scmp.ge.s32.totalorder %s28, 2
      %s30 = scalar_select %p29, 0, %s28
      %s32 = sadd.s32 %s31, 1
      %p35 = scmp.eq.s32.totalorder %s11, 1
      %p36 = scmp.ne.s32.totalorder %s31, %s33
      %p37 = scmp.eq.s32.totalorder %s11, 0
      %p38 = por %p36, %p37
      %p39 = scmp.ne.s32.totalorder %s31, %s33
      %p40 = scmp.eq.s32.totalorder %s16, 1
      %p41 = por %p39, %p40
      %p42 = scmp.ne.s32.totalorder %s33, %s34
      %p43 = scmp.eq.s32.totalorder %s16, 0
      %p44 = por %p42, %p43
      %p45 = scmp.ne.s32.totalorder %s33, %s34
      %p46 = scmp.eq.s32.totalorder %s17, 1
      %p47 = por %p45, %p46
      %p49 = scmp.ne.s32.totalorder %s34, %s48
      %p50 = scmp.eq.s32.totalorder %s17, 0
      %p51 = por %p49, %p50
      %s52 = ssub.s32 %s18, %s30
      %s53 = ssub.s32 %s19, %s26
      %s54 = sor.u32 %s52, %s53
      %p55 = scmp.eq.s32.totalorder %s54, 0
      %s57 = sadd.s32 %s56, 1
      %s58 = scalar_select %p55, %s56, %s57
      %p61 = pneg %p55
      %p62 = scmp.eq.s32.totalorder %s11, 1
      %p63 = por %p61, %p62
      %p64 = scmp.ne.s32.totalorder %s56, %s59
      %p65 = scmp.eq.s32.totalorder %s11, 0
      %p66 = por %p64, %p65
      %p67 = scmp.ne.s32.totalorder %s56, %s59
      %p68 = scmp.eq.s32.totalorder %s16, 1
      %p69 = por %p67, %p68
      %p70 = scmp.ne.s32.totalorder %s59, %s60
      %p71 = scmp.eq.s32.totalorder %s16, 0
      %p72 = por %p70, %p71
      %p73 = scmp.ne.s32.totalorder %s59, %s60
      %p74 = scmp.eq.s32.totalorder %s17, 1
      %p75 = por %p73, %p74
      %p77 = scmp.ne.s32.totalorder %s60, %s76
      %p78 = scmp.eq.s32.totalorder %s17, 0
      %p79 = por %p77, %p78
      %s80 = ssub.s32 %s18, %s30
      %s81 = ssub.s32 %s19, %s26
      %s82 = sor.u32 %s80, %s81
      %p83 = scmp.eq.s32.totalorder %s82, 0
      %s85 = sadd.s32 %s84, 1
      %s86 = scalar_select %p83, %s84, %s85
      %p89 = pneg %p83
      %p90 = scmp.eq.s32.totalorder %s11, 1
      %p91 = por %p89, %p90
      %p92 = scmp.ne.s32.totalorder %s84, %s87
      %p93 = scmp.eq.s32.totalorder %s11, 0
      %p94 = por %p92, %p93
      %p95 = scmp.ne.s32.totalorder %s84, %s87
      %p96 = scmp.eq.s32.totalorder %s16, 1
      %p97 = por %p95, %p96
      %p98 = scmp.ne.s32.totalorder %s87, %s88
      %p99 = scmp.eq.s32.totalorder %s16, 0
      %p100 = por %p98, %p99
      %p101 = scmp.ne.s32.totalorder %s87, %s88
      %p102 = scmp.eq.s32.totalorder %s17, 1
      %p103 = por %p101, %p102
      %p105 = scmp.ne.s32.totalorder %s88, %s104
      %p106 = scmp.eq.s32.totalorder %s17, 0
      %p107 = por %p105, %p106
      %p108 = scmp.le.s32.totalorder 1, %s11
      %p109 = scmp.lt.s32.totalorder %s11, 3
      %p110 = pnand %p108, %p109
      %p111 = pneg %p110
      // Predicated region
      $region9: #{tpu_custom_call.1} parent=5 // pred_check
        _
      $region10: #{tpu_custom_call.1} parent=5 // pred_check_branch
        %113 = sbr.rel (%p110) target = $region12
      $region11: #{tpu_custom_call.1} parent=5 // pred_region
        %s114 = ssub.s32 %s11, 1
        // Predicated region
        $region13: #{tpu_custom_call.1} parent=11 // pred_check
          %p115 = pneg %p44
        $region14: #{tpu_custom_call.1} parent=11 // pred_check_branch
          %117 = sbr.rel (%p115) target = $region16
        $region15: #{tpu_custom_call.1} parent=11 // pred_region
          _
        $region16: #{tpu_custom_call.1} parent=11 // pred_fallthru
          _
      $region12: #{tpu_custom_call.1} parent=5 // pred_fallthru
        _
      %p118 = scmp.lt.s32.totalorder %s11, 2
      // Predicated region
      $region17: #{tpu_custom_call.1} parent=5 // pred_check
        %p119 = pneg %p118
      $region18: #{tpu_custom_call.1} parent=5 // pred_check_branch
        %121 = sbr.rel (%p119) target = $region20
      $region19: #{tpu_custom_call.1} parent=5 // pred_region
        // Predicated region
        $region21: #{tpu_custom_call.1} parent=19 // pred_check
          %p122 = pneg %p66
        $region22: #{tpu_custom_call.1} parent=19 // pred_check_branch
          %124 = sbr.rel (%p122) target = $region24
        $region23: #{tpu_custom_call.1} parent=19 // pred_region
          %s125 = smul.u32 2, %s19
          %p126 = scmp.lt.s32.totalorder %s18, 1
          %s127 = scalar_select %p126, %s18, 1
          %p128 = scmp.lt.s32.totalorder %s125, 1
          %s129 = scalar_select %p128, %s125, 1
          %s130 = smul.addr %s127, 2
          %s131 = sadd.s32 %s129, %s130
          %s132 = scalar_lea.vmem %s1, %s131
          %s133 = smul.u32 2, %s19
        $region24: #{tpu_custom_call.1} parent=19 // pred_fallthru
          _
      $region20: #{tpu_custom_call.1} parent=5 // pred_fallthru
        _
      %p134 = scmp.le.s32.totalorder 1, %s11
      %p135 = scmp.lt.s32.totalorder %s11, 3
      %p136 = pnand %p134, %p135
      %p137 = pneg %p136
      // Predicated region
      $region25: #{tpu_custom_call.1} parent=5 // pred_check
        _
      $region26: #{tpu_custom_call.1} parent=5 // pred_check_branch
        %139 = sbr.rel (%p136) target = $region28
      $region27: #{tpu_custom_call.1} parent=5 // pred_region
        %s140 = ssub.s32 %s11, 1
        %p141 = pneg %p44
        %p142 = pneg %p41
        %s143 = smul.u32 2, %s21
        %p144 = scmp.lt.s32.totalorder %s20, 1
        %s145 = scalar_select %p144, %s20, 1
        %p146 = scmp.lt.s32.totalorder %s143, 1
        %s147 = scalar_select %p146, %s143, 1
        %s148 = smul.addr %s145, 2
        %s149 = sadd.s32 %s147, %s148
        %s150 = scalar_lea.vmem %s1, %s149
        %p151 = pneg %p72
        %p152 = pneg %p69
        %p153 = pneg %p100
        %p154 = pneg %p97
        %s155 = sand.u32 %s87, 1
        %s156 = scalar_lea.sflag [#allocation3], %s155
        %s157 = sand.u32 %s87, 1
        %s158 = smul.addr %s157, 8
        %s159 = scalar_lea.vmem [#allocation2], %s158
        %s160 = smul.u32 2, %s21
        %p161 = scmp.lt.s32.totalorder %s20, 1
        %s162 = scalar_select %p161, %s20, 1
        %p163 = scmp.lt.s32.totalorder %s160, 1
        %s164 = scalar_select %p163, %s160, 1
        %s165 = smul.addr %s162, 2
        %s166 = sadd.s32 %s164, %s165
        %s167 = scalar_lea.vmem %s1, %s166
        %s168 = smul.u32 2, %s21
        %s169 = smul.u32 2, %s21
        %v170 = vld [vmem:[%s167] sm:$0x3]
        %v171 = vld [vmem:[%s0] sm:$0xf]
        %v172 = vmul.f32 %v170, %v170
        %v174 = vlaneseq
        %v175 = vshrl.u32 %v174, 7
        %v176 = vsub.s32 0, %v175
        %v177 = vrot.slane %v172, %v176
        %v178 = vlaneseq
        %v179 = vshrl.u32 %v178, 7
        %v180 = vsub.s32 1, %v179
        %v181 = vrot.slane %v172, %v180
        %185 = vset.pattern.permute.xlu0 0
        %186 = vperm.xlu0 %185, %v171
        %v187 = vpop.permute.xlu0 %186
        %v189 = vmul.f32 %v177, %v187
        %v190 = vmul.f32 %v181, %v187
        %v191 = vmul.f32 %v189, 1.442695
        %v192 = vpow.pop %v191
        %v193 = vmul.f32 %v190, 1.442695
        %v194 = vpow.pop %v193
        %v197 = vcombine.low %v192, %v194
        %199 = vst [vmem:[%s159] sm:$0xff] %v197
        %s200 = sand.u32 %s87, 1
        %s201 = scalar_lea.sflag [#allocation3], %s200
        %s202 = sand.u32 %s87, 1
        %s203 = smul.addr %s202, 8
        %s204 = scalar_lea.vmem [#allocation2], %s203
        // Predicated region
        $region29: #{tpu_custom_call.1} parent=27 // pred_check
          %p205 = pneg %p97
        $region30: #{tpu_custom_call.1} parent=27 // pred_check_branch
          %207 = sbr.rel (%p205) target = $region32
        $region31: #{tpu_custom_call.1} parent=27 // pred_region
          %s208 = smul.u32 2, %s21
          %s210 = ssub.s32 128, 128
          %211 = vsyncadd %s201, %s210
          %s212 = smul.addr %s20, 2
          %s213 = sadd.s32 %s208, %s212
          %s214 = smul.addr %s213, 64
          %s215 = scalar_lea.hbm %s2, %s214
          %s217 = sshll.u32 %s204, 4
          %s218 = int_to_ptr.vmem [resolvable:$true] %s217
          %220 = dma.vmem_to_hbm [thread:$0]  %s218, 128, %s215, %s201
        $region32: #{tpu_custom_call.1} parent=27 // pred_fallthru
          _
      $region28: #{tpu_custom_call.1} parent=5 // pred_fallthru
        _
      %p221 = scmp.le.s32.totalorder 2, %s11
      // Predicated region
      $region33: #{tpu_custom_call.1} parent=5 // pred_check
        %p222 = pneg %p221
      $region34: #{tpu_custom_call.1} parent=5 // pred_check_branch
        %224 = sbr.rel (%p222) target = $region36
      $region35: #{tpu_custom_call.1} parent=5 // pred_region
        %s225 = ssub.s32 %s11, 2
        // Predicated region
        $region37: #{tpu_custom_call.1} parent=35 // pred_check
          %p226 = pneg %p103
        $region38: #{tpu_custom_call.1} parent=35 // pred_check_branch
          %228 = sbr.rel (%p226) target = $region40
        $region39: #{tpu_custom_call.1} parent=35 // pred_region
          %s229 = sand.u32 %s88, 1
          %s230 = scalar_lea.sflag [#allocation3], %s229
          %s231 = sand.u32 %s88, 1
          %s232 = smul.addr %s231, 8
          %s233 = scalar_lea.vmem [#allocation2], %s232
          %234 = dma.done %s230, 128
        $region40: #{tpu_custom_call.1} parent=35 // pred_fallthru
          _
      $region36: #{tpu_custom_call.1} parent=5 // pred_fallthru
        _
    $region6: #{tpu_custom_call.1} parent=1 // loop_footer
      %s15 = sadd.s32 1, %s11
    $region7: #{tpu_custom_call.1} parent=1 // loop_footer_branch
      %10 = sbr.rel target = $region3
    $region8: #{tpu_custom_call.1} parent=1 // loop_exit
      _
    %235 = vsyncpa [#allocation3], 1
    %s236 = scalar_lea.sflag [#allocation3], 1
    %237 = vsyncpa %s236, 1

</llo_original>
